<compile_context>
chip_gen: v7x
topology: tpu7x:2x2x1
jax: 0.10.0
libtpu: 0.0.40
codegen_flags: <defaults>
</compile_context>

<pallas_src>
import math
import functools

import jax
import jax.numpy as jnp
from jax import lax
from jax.experimental import pallas as pl
from jax.experimental.pallas import tpu as pltpu


_TARGET_BLOCK_BYTES = 4 * 1024 * 1024   # ~4 MiB per block: >=85% of measured HBM
                                        # roofline; 3 arrays x 2 buffers fits the
_VMEM_LIMIT_BYTES = 48 * 1024 * 1024    # 48 MiB scoped limit (v7x has 64 MiB/TC).


def _i32c(v):
    """A uint32 literal as a wrapped (two's-complement) int32 constant."""
    v &= 0xFFFFFFFF
    if v >= 1 << 31:
        v -= 1 << 32
    return jnp.int32(v)


def _srl(x, k):
    """Logical right shift on int32 (arithmetic shift + mask of the high bits)."""
    return (x >> k) & jnp.int32((1 << (32 - k)) - 1)


def _pe_dropout_kernel(seed_ref, x_ref, pe_ref, o_ref, *,
                       dropout_p, apply_dropout, use_hw_prng):
    """One block: o = dropout(x + pe).

    x_ref / o_ref : (TS, B, D) or (TS, B*D)
    pe_ref        : (TS, 1, D) (broadcast over batch in-kernel) or (TS, B*D)
    """
    s = x_ref[...] + pe_ref[...]          # jnp broadcasting covers both layouts

    if apply_dropout:
        shape = tuple(x_ref.shape)

        if use_hw_prng:
            # TPU hardware PRNG: one seed + one bits draw for the whole block.
            # Re-seeded deterministically per block (seed + program_id), so grid
            # steps are order-independent and "parallel" semantics are safe.
            pltpu.prng_seed(seed_ref[0] + pl.program_id(0))
            bits = pltpu.prng_random_bits(shape)
            h = bits if bits.dtype == jnp.int32 else pltpu.bitcast(bits, jnp.int32)
        else:
            # Portable stateless hash: murmur3 fmix32 over the global element
            # index (int32 arithmetic wraps == modular uint32 arithmetic).
            n_block = math.prod(shape)
            local = jnp.zeros(shape, dtype=jnp.int32)
            stride = 1
            for ax in range(len(shape) - 1, -1, -1):
                local = local + lax.broadcasted_iota(jnp.int32, shape, ax) * stride
                stride *= shape[ax]
            h = local + pl.program_id(0) * n_block          # global counter
            h = h ^ (seed_ref[0] * _i32c(0x9E3779B9))       # fold in the seed
            h = (h ^ _srl(h, 16)) * _i32c(0x85EBCA6B)
            h = (h ^ _srl(h, 13)) * _i32c(0xC2B2AE35)
            h = h ^ _srl(h, 16)

        # keep with prob (1 - p): h is uniform over the full signed 32-bit range,
        # so a single signed compare against (p*2^32 - 2^31) gives the right rate.
        t_u32 = min(int(round(float(dropout_p) * 4294967296.0)), 4294967295)
        keep = h >= jnp.int32(t_u32 - 2147483648)

        scale = 1.0 / (1.0 - float(dropout_p))
        s = s * jnp.where(keep,
                          jnp.asarray(scale, dtype=s.dtype),
                          jnp.asarray(0.0, dtype=s.dtype))

    o_ref[...] = s.astype(o_ref.dtype)


def make_pos_encoding(dim_model, max_len, dtype=jnp.float32):
    """Deterministic buffer identical to the PyTorch __init__ construction."""
    positions = jnp.arange(max_len, dtype=jnp.float32)[:, None]             # (L, 1)
    division_term = jnp.exp(
        jnp.arange(0, dim_model, 2, dtype=jnp.float32) * (-math.log(10000.0) / dim_model)
    )                                                                        # (D/2,)
    pe = jnp.zeros((max_len, dim_model), dtype=jnp.float32)
    pe = pe.at[:, 0::2].set(jnp.sin(positions * division_term))
    pe = pe.at[:, 1::2].set(jnp.cos(positions * division_term))
    # .unsqueeze(0).transpose(0, 1)  ->  (max_len, 1, dim_model)
    return pe[:, None, :].astype(dtype)


def positional_encoding_forward(token_embedding, pos_encoding, *,
                                dropout_p, seed=0, training=True, use_hw_prng=None):
    """token_embedding: (S, B, D); pos_encoding: (max_len, 1, D) -> (S, B, D)."""
    S, B, D = token_embedding.shape
    dtype = token_embedding.dtype
    itemsize = jnp.dtype(dtype).itemsize
    pe = pos_encoding[:S].astype(dtype)                        # (S, 1, D)
    apply_dropout = bool(training) and float(dropout_p) > 0.0

    if apply_dropout and float(dropout_p) >= 1.0:              # torch: p=1 -> all zeros
        return jnp.zeros_like(token_embedding)

    if use_hw_prng is None:
        # Hardware PRNG only lowers through Mosaic; fall back to the stateless
        # hash on CPU / interpret backends.
        use_hw_prng = any(d.platform == "tpu" for d in jax.devices())

    kernel = functools.partial(_pe_dropout_kernel,
                               dropout_p=float(dropout_p),
                               apply_dropout=apply_dropout,
                               use_hw_prng=bool(use_hw_prng))
    seed_arr = jnp.asarray([seed], dtype=jnp.int32)
    row_bytes = B * D * itemsize
    cparams = pltpu.CompilerParams(
        dimension_semantics=("parallel",),        # stateless-per-step RNG -> safe
        vmem_limit_bytes=_VMEM_LIMIT_BYTES,
    )

    if D % 128 == 0:
        # Already lane-dense: 3-D blocks, PE stays (TS, 1, D) -> no extra HBM read.
        ts = max(1, min(S, _TARGET_BLOCK_BYTES // max(1, row_bytes)))
        return pl.pallas_call(
            kernel,
            out_shape=jax.ShapeDtypeStruct((S, B, D), dtype),
            grid_spec=pltpu.PrefetchScalarGridSpec(
                num_scalar_prefetch=1,
                grid=(pl.cdiv(S, ts),),
                in_specs=[
                    pl.BlockSpec((ts, B, D), lambda i, sref: (i, 0, 0)),
                    pl.BlockSpec((ts, 1, D), lambda i, sref: (i, 0, 0)),
                ],
                out_specs=pl.BlockSpec((ts, B, D), lambda i, sref: (i, 0, 0)),
            ),
            compiler_params=cparams,
        )(seed_arr, token_embedding, pe)

    # D not a multiple of 128 (e.g. the demo's D=32): fold batch into the lane
    # axis so loads/stores are as lane-dense as the shape allows; PE is tiled
    # over batch wrapper-side to match (cheap in this small-D regime, and it
    # buys unmasked vector stores).
    x2 = token_embedding.reshape(S, B * D)
    pe2 = jnp.broadcast_to(pe, (S, B, D)).reshape(S, B * D)
    ts = max(1, _TARGET_BLOCK_BYTES // max(1, row_bytes))
    if ts >= S:
        ts = S
    elif ts >= 8:
        ts = (ts // 8) * 8          # sublane dim: multiple of 8 (or full extent)
    else:
        ts = min(8, S)
    out2 = pl.pallas_call(
        kernel,
        out_shape=jax.ShapeDtypeStruct((S, B * D), dtype),
        grid_spec=pltpu.PrefetchScalarGridSpec(
            num_scalar_prefetch=1,
            grid=(pl.cdiv(S, ts),),
            in_specs=[
                pl.BlockSpec((ts, B * D), lambda i, sref: (i, 0)),
                pl.BlockSpec((ts, B * D), lambda i, sref: (i, 0)),
            ],
            out_specs=pl.BlockSpec((ts, B * D), lambda i, sref: (i, 0)),
        ),
        compiler_params=cparams,
    )(seed_arr, x2, pe2)
    return out2.reshape(S, B, D)


if __name__ == "__main__":
    # Module hyperparameters
    dim_model = 32
    max_len = 16
    dropout_p = 0.1

    # Example input: (seq=8, batch=2, dim_model=32)
    S, B, D = 8, 2, dim_model
    key = jax.random.PRNGKey(0)
    x = jax.random.normal(key, (S, B, D), dtype=jnp.float32)

    pe_buf = make_pos_encoding(dim_model, max_len)

    # 1) Eval-mode (dropout identity) -> exact semantics vs reference.
    out_eval = positional_encoding_forward(x, pe_buf, dropout_p=dropout_p,
                                           training=False)
    out_eval = jax.block_until_ready(out_eval)
    ref_eval = x + pe_buf[:S]                    # broadcast (S,1,D) over batch
    assert out_eval.shape == (S, B, D)
    assert jnp.allclose(out_eval, ref_eval, atol=1e-6), "eval-mode mismatch"

    # 2) Training-mode (stochastic inverted dropout).  RNG stream is not
    #    bit-identical to torch (and depends on block size / backend), but the
    #    distributional semantics of nn.Dropout are reproduced exactly.
    out_train = positional_encoding_forward(x, pe_buf, dropout_p=dropout_p,
                                            seed=1234, training=True)
    out_train = jax.block_until_ready(out_train)
    assert out_train.shape == (S, B, D)
    assert bool(jnp.all(jnp.isfinite(out_train)))
    scaled_ref = ref_eval / (1.0 - dropout_p)
    kept = out_train != 0.0
    assert bool(jnp.allclose(jnp.where(kept, out_train, scaled_ref), scaled_ref,
                             atol=1e-5)), "training-mode dropout scaling mismatch"
    n_drop = int(jnp.sum(~kept))
    assert 0 < n_drop < out_train.size, "dropout mask looks degenerate"

    print("KERNEL_OK")
</pallas_src>

<mosaic_0001>
module attributes {stable_mosaic.version = 11 : i64} {
  func.func @_pe_dropout_kernel(%arg0: i32, %arg1: memref<1xi32, #tpu.memory_space<smem>>, %arg2: memref<8x64xf32, #tpu.memory_space<vmem>>, %arg3: memref<8x64xf32, #tpu.memory_space<vmem>>, %arg4: memref<8x64xf32, #tpu.memory_space<vmem>>) attributes {dimension_semantics = [#tpu.dimension_semantics<parallel>], iteration_bounds = array<i64: 1>, scalar_prefetch = 1 : i64, scratch_operands = 0 : i64, tpu.core_type = #tpu.core_type<tc>, window_params = [{transform_indices = @transform_0, window_bounds = array<i64: 8, 64>}, {transform_indices = @transform_1, window_bounds = array<i64: 8, 64>}, {transform_indices = @transform_2, window_bounds = array<i64: 8, 64>}]} {
    %c0 = arith.constant 0 : index
    %c0_0 = arith.constant 0 : index
    %0 = vector.load %arg2[%c0, %c0_0] : memref<8x64xf32, #tpu.memory_space<vmem>>, vector<8x64xf32>
    %c0_1 = arith.constant 0 : index
    %c0_2 = arith.constant 0 : index
    %1 = vector.load %arg3[%c0_1, %c0_2] : memref<8x64xf32, #tpu.memory_space<vmem>>, vector<8x64xf32>
    %2 = arith.addf %0, %1 : vector<8x64xf32>
    %c0_3 = arith.constant 0 : index
    %c0_4 = arith.constant 0 : index
    %3 = vector.load %arg4[%c0_3, %c0_4] : memref<8x64xf32, #tpu.memory_space<vmem>>, vector<8x64xf32>
    tpu.vector_store %arg4[%c0_3, %c0_4], %2 {strides = array<i32>} : memref<8x64xf32, #tpu.memory_space<vmem>>, vector<8x64xf32>,
    return
  }
  func.func @transform_0(%arg0: i32, %arg1: memref<1xi32, #tpu.memory_space<smem>>) -> (i32, i32) {
    %c0_i32 = arith.constant 0 : i32
    %c0_i32_0 = arith.constant 0 : i32
    return %arg0, %c0_i32 : i32, i32
  }
  func.func @transform_1(%arg0: i32, %arg1: memref<1xi32, #tpu.memory_space<smem>>) -> (i32, i32) {
    %c0_i32 = arith.constant 0 : i32
    %c0_i32_0 = arith.constant 0 : i32
    return %arg0, %c0_i32 : i32, i32
  }
  func.func @transform_2(%arg0: i32, %arg1: memref<1xi32, #tpu.memory_space<smem>>) -> (i32, i32) {
    %c0_i32 = arith.constant 0 : i32
    %c0_i32_0 = arith.constant 0 : i32
    return %arg0, %c0_i32 : i32, i32
  }
}

</mosaic_0001>

<llo_original>
// kernel: tpu_custom_call.1
$region0: #{tpu_custom_call.1}
  #allocation0 [shape = 'u32[]', space=smem, size = 0x4, offset = 0x4, fixed_abs, tag = 'smem constant byte address 0x4 - core index']
  #allocation1 [shape = 'u32[144,128]{1,0:T(1,128)}', space=vmem, size = 0x12000, scoped, tag = 'internal scratch']
  #allocation2 [shape = 's32[1]{0}', space=sflag, size = 0x4, scoped, tag = 'scoped memory for tpu_custom_call.1']
  #allocation3 [shape = 's32[1]{0:T(128)S(6)}', space=smem, size = 0x200, scoped, tag = 'prefetched SMEM operand 0']
  %s0 = inlined_call_operand.<no memory space> [shape: s32[1], index: 0, kind: input, shape index: {}]
  %s1 = inlined_call_operand.hbm [shape: f32[8,64], index: 1, kind: input, shape index: {}]
  %s2 = inlined_call_operand.hbm [shape: f32[8,64], index: 2, kind: input, shape index: {}]
  %s3 = inlined_call_operand.hbm [shape: f32[8,64], index: 3, kind: output, shape index: {}]
  %s4 = sld [smem:[#allocation0]]
  $region26: #{tpu_custom_call.1} parent=0
    _
  %s6 = ssub.s32 1, %s4
  %s7 = scalar_select 0, %s6, %s4
  %8 = sst [smem:[#allocation3]] %s0
  $region1: #{tpu_custom_call.1} parent=0
    #allocation4 [shape = 'u8[4096]{0}', space=vmem, size = 0x1000, scoped, tag = 'input window, operand 1, single buffered']
    #allocation5 [shape = 's32[1]{0}', space=sflag, size = 0x4, scoped, tag = 'scoped memory for tpu_custom_call.1']
    #allocation6 [shape = 's32[1]{0}', space=sflag, size = 0x4, scoped, tag = 'scoped memory for tpu_custom_call.1']
    #allocation7 [shape = 'u8[4096]{0}', space=vmem, size = 0x1000, scoped, tag = 'input window, operand 2, single buffered']
    #allocation8 [shape = 's32[1]{0}', space=sflag, size = 0x4, scoped, tag = 'scoped memory for tpu_custom_call.1']
    #allocation9 [shape = 'u8[4096]{0}', space=vmem, size = 0x1000, scoped, tag = 'output window, operand 0, single buffered']
    %9 = vsyncpa [#allocation5], 0
    %10 = vsyncpa [#allocation8], 0
    %11 = vsyncpa [#allocation6], 0
    // Predicated region
    $region2: #{tpu_custom_call.1} parent=1 // pred_check
      _
    $region3: #{tpu_custom_call.1} parent=1 // pred_check_branch
      %13 = sbr.rel (0) target = $region5
    $region4: #{tpu_custom_call.1} parent=1 // pred_region
      %s15 = ssub.s32 128, 128
      %16 = vsyncadd [#allocation5], %s15
      %s18 = sshll.u32 [#allocation4], 4
      %s19 = int_to_ptr.vmem [resolvable:$true] %s18
      %21 = dma.hbm_to_vmem [thread:$0]  %s1, 128, %s19, [#allocation5]
    $region5: #{tpu_custom_call.1} parent=1 // pred_fallthru
      _
    // Predicated region
    $region6: #{tpu_custom_call.1} parent=1 // pred_check
      _
    $region7: #{tpu_custom_call.1} parent=1 // pred_check_branch
      %23 = sbr.rel (0) target = $region9
    $region8: #{tpu_custom_call.1} parent=1 // pred_region
      %s25 = ssub.s32 128, 128
      %26 = vsyncadd [#allocation8], %s25
      %s28 = sshll.u32 [#allocation7], 4
      %s29 = int_to_ptr.vmem [resolvable:$true] %s28
      %31 = dma.hbm_to_vmem [thread:$0]  %s2, 128, %s29, [#allocation8]
    $region9: #{tpu_custom_call.1} parent=1 // pred_fallthru
      _
    // Predicated region
    $region10: #{tpu_custom_call.1} parent=1 // pred_check
      _
    $region11: #{tpu_custom_call.1} parent=1 // pred_check_branch
      %33 = sbr.rel (0) target = $region13
    $region12: #{tpu_custom_call.1} parent=1 // pred_region
      %34 = dma.done [#allocation5], 128
    $region13: #{tpu_custom_call.1} parent=1 // pred_fallthru
      _
    // Predicated region
    $region14: #{tpu_custom_call.1} parent=1 // pred_check
      _
    $region15: #{tpu_custom_call.1} parent=1 // pred_check_branch
      %36 = sbr.rel (0) target = $region17
    $region16: #{tpu_custom_call.1} parent=1 // pred_region
      %37 = dma.done [#allocation8], 128
    $region17: #{tpu_custom_call.1} parent=1 // pred_fallthru
      _
    %v38 = vld [vmem:[#allocation4] sm:$0xff]
    %v39 = vld [vmem:[#allocation7] sm:$0xff]
    %v40 = vadd.f32 %v38, %v39
    %vm41 = vcmask 523264
    %42 = vst.msk [vmem:[#allocation9] sm:$0xff] %vm41, %v40
    // Predicated region
    $region18: #{tpu_custom_call.1} parent=1 // pred_check
      _
    $region19: #{tpu_custom_call.1} parent=1 // pred_check_branch
      %44 = sbr.rel (0) target = $region21
    $region20: #{tpu_custom_call.1} parent=1 // pred_region
      %s46 = ssub.s32 128, 128
      %47 = vsyncadd [#allocation6], %s46
      %s49 = sshll.u32 [#allocation9], 4
      %s50 = int_to_ptr.vmem [resolvable:$true] %s49
      %52 = dma.vmem_to_hbm [thread:$0]  %s50, 128, %s3, [#allocation6]
    $region21: #{tpu_custom_call.1} parent=1 // pred_fallthru
      _
    // Predicated region
    $region22: #{tpu_custom_call.1} parent=1 // pred_check
      _
    $region23: #{tpu_custom_call.1} parent=1 // pred_check_branch
      %54 = sbr.rel (0) target = $region25
    $region24: #{tpu_custom_call.1} parent=1 // pred_region
      %55 = dma.done [#allocation6], 128
    $region25: #{tpu_custom_call.1} parent=1 // pred_fallthru
      _
    %56 = vsyncpa [#allocation5], 1
    %57 = vsyncpa [#allocation8], 1
    %58 = vsyncpa [#allocation6], 1

</llo_original>
